<compile_context>
chip_gen: v7x
topology: tpu7x:2x2x1
jax: 0.10.0
libtpu: 0.0.40
codegen_flags: <defaults>
</compile_context>

<pallas_src>
import functools

import jax
import jax.numpy as jnp
from jax.experimental import pallas as pl
from jax.experimental.pallas import tpu as pltpu

LN_EPS = 1e-5


def _layernorm(x, w, b, eps=LN_EPS):
    mu = jnp.mean(x, axis=-1, keepdims=True)
    xc = x - mu
    var = jnp.mean(xc * xc, axis=-1, keepdims=True)
    return xc * jax.lax.rsqrt(var + eps) * w + b


def _gelu_tanh(x):
    # GELU(approximate='tanh'), f32 math.
    c = 0.7978845608028654  # sqrt(2/pi)
    return 0.5 * x * (1.0 + jnp.tanh(c * (x + 0.044715 * x * x * x)))


def _block_kernel(x0_ref, x_ref,
                  ln1w_ref, ln1b_ref,
                  wv_ref, bv_ref,
                  wo_ref, bo_ref,
                  ln2w_ref, ln2b_ref,
                  wfc_ref, bfc_ref,
                  wpj_ref, bpj_ref,
                  o_ref):
    B, TM, N = x_ref.shape

    # ---------------- attention (exact closed form) ----------------
    # Top-left causal mask with L=1 => softmax is an exact one-hot on key 0:
    #   y = v[:, 0, :];  att = y @ Wo + bo.   (q / k are mathematically dead.)
    h0 = _layernorm(x0_ref[...], ln1w_ref[...], ln1b_ref[...])              # (B, N) f32
    v0 = jnp.dot(h0.astype(jnp.bfloat16), wv_ref[...],
                 preferred_element_type=jnp.float32) + bv_ref[...]          # (B, N)
    att = jnp.dot(v0.astype(jnp.bfloat16), wo_ref[...],
                  preferred_element_type=jnp.float32) + bo_ref[...]         # (B, N)

    # -------- residual + ln_2 + MLP (row-parallel, M = B*TM rows) ----------
    x = x_ref[...]                                                          # (B, TM, N) f32
    x1 = x + att[:, None, :]                    # broadcast att over T, as in PyTorch
    h2 = _layernorm(x1.reshape(B * TM, N), ln2w_ref[...], ln2b_ref[...])    # (B*TM, N)
    f = jnp.dot(h2.astype(jnp.bfloat16), wfc_ref[...],
                preferred_element_type=jnp.float32) + bfc_ref[...]          # (B*TM, 4N)
    f = _gelu_tanh(f)
    m = jnp.dot(f.astype(jnp.bfloat16), wpj_ref[...],
                preferred_element_type=jnp.float32) + bpj_ref[...]          # (B*TM, N)

    o_ref[...] = (x1 + m.reshape(B, TM, N)).astype(o_ref.dtype)


def _choose_tm(T, max_tm=512):
    tm = max_tm
    while tm >= 8:
        if T % tm == 0:
            return tm
        tm //= 2
    return T  # fall back to the full (unpadded) T dimension


def block_forward(x, params, n_heads, kv_cache=None):
    """Pallas equivalent of Block.forward(x) with input_pos=None, mask=None."""
    del n_heads  # the one-hot attention result is head-count independent
    (ln1w, ln1b, wkv, bkv, wq, bq, wo, bo,
     ln2w, ln2b, wfc, bfc, wpj, bpj) = params
    del wq, bq  # dead under the top-left (L=1) causal mask

    B, T, N = x.shape
    H = 4 * N
    TM = _choose_tm(T)
    grid = (T // TM,)

    # bf16 matmul operands (weights); biases / LN params stay f32.
    bf16 = jnp.bfloat16
    wv = wkv[:, N:].astype(bf16)      # only the V half of c_attn is live
    bv = bkv[:, N:]
    wo_b = wo.astype(bf16)
    wfc_b = wfc.astype(bf16)
    wpj_b = wpj.astype(bf16)
    x0 = x[:, 0, :]                   # the row the one-hot attention selects

    def const(shape):
        nd = len(shape)
        return pl.BlockSpec(shape, lambda i, _nd=nd: (0,) * _nd)

    in_specs = [
        const((B, N)),                                    # x0 = x[:, 0, :]
        pl.BlockSpec((B, TM, N), lambda i: (0, i, 0)),    # x, tiled along T
        const((1, N)), const((1, N)),                     # ln_1 weight / bias
        const((N, N)), const((1, N)),                     # c_attn (V half)
        const((N, N)), const((1, N)),                     # attn.c_proj
        const((1, N)), const((1, N)),                     # ln_2 weight / bias
        const((N, H)), const((1, H)),                     # mlp.c_fc
        const((H, N)), const((1, N)),                     # mlp.c_proj
    ]

    # Explicit VMEM budget: double-buffered bf16 weights + f32 activation tiles.
    w_bytes = 2 * (N * N + N * N + N * H + H * N)         # bf16 weights
    act_bytes = 4 * (4 * B * TM * N + B * TM * H)         # x/out blocks + GELU intermediate
    est = 2 * w_bytes + act_bytes + (4 << 20)
    vmem_limit = int(min(max(est, 32 << 20), 64 << 20))

    out = pl.pallas_call(
        _block_kernel,
        out_shape=jax.ShapeDtypeStruct((B, T, N), jnp.float32),
        grid_spec=pltpu.PrefetchScalarGridSpec(
            num_scalar_prefetch=0,
            grid=grid,
            in_specs=in_specs,
            out_specs=pl.BlockSpec((B, TM, N), lambda i: (0, i, 0)),
        ),
        compiler_params=pltpu.CompilerParams(
            dimension_semantics=("parallel",),
            vmem_limit_bytes=vmem_limit),
    )(x0, x,
      ln1w, ln1b, wv, bv, wo_b, bo,
      ln2w, ln2b, wfc_b, bfc, wpj_b, bpj)
    return out, kv_cache


# ---------------- pure-JAX reference (mirrors the PyTorch code) ----------------
def block_reference(x, params, n_heads):
    (ln1w, ln1b, wkv, bkv, wq, bq, wo, bo,
     ln2w, ln2b, wfc, bfc, wpj, bpj) = params
    B, T, N = x.shape
    hd = N // n_heads

    def ln(z, w, b):
        mu = z.mean(-1, keepdims=True)
        var = ((z - mu) ** 2).mean(-1, keepdims=True)
        return (z - mu) / jnp.sqrt(var + LN_EPS) * w + b

    h = ln(x, ln1w, ln1b)
    kv = h @ wkv + bkv
    k, v = kv[..., :N], kv[..., N:]
    q = h[:, T - 1:, :] @ wq + bq
    qh = q.reshape(B, 1, n_heads, hd).transpose(0, 2, 1, 3)
    kh = k.reshape(B, T, n_heads, hd).transpose(0, 2, 1, 3)
    vh = v.reshape(B, T, n_heads, hd).transpose(0, 2, 1, 3)
    s = jnp.einsum('bhqd,bhkd->bhqk', qh, kh) / jnp.sqrt(hd)
    causal = jnp.tril(jnp.ones((1, T)))            # top-left aligned (L=1, S=T)
    s = jnp.where(causal[None, None] > 0, s, -jnp.inf)
    p = jax.nn.softmax(s, axis=-1)
    y = jnp.einsum('bhqk,bhkd->bhqd', p, vh)
    y = y.transpose(0, 2, 1, 3).reshape(B, 1, N)
    att = y @ wo + bo
    x1 = x + att
    h2 = ln(x1, ln2w, ln2b)
    f = jax.nn.gelu(h2 @ wfc + bfc, approximate=True)
    return x1 + f @ wpj + bpj


if __name__ == "__main__":
    B, T, N, n_heads = 2, 8, 128, 4   # n_embd=128, n_headers=4
    H = 4 * N

    key = jax.random.PRNGKey(0)
    ks = jax.random.split(key, 12)

    def w(k, shape):
        return 0.02 * jax.random.normal(k, shape, jnp.float32)

    x = jax.random.normal(ks[0], (B, T, N), jnp.float32)

    params = (
        jnp.ones((1, N), jnp.float32), jnp.zeros((1, N), jnp.float32),    # ln_1
        w(ks[1], (N, 2 * N)), w(ks[2], (1, 2 * N)),                       # c_attn
        w(ks[3], (N, N)),     w(ks[4], (1, N)),                           # c_attn_q
        w(ks[5], (N, N)),     w(ks[6], (1, N)),                           # attn c_proj
        jnp.ones((1, N), jnp.float32), jnp.zeros((1, N), jnp.float32),    # ln_2
        w(ks[7], (N, H)),     w(ks[8], (1, H)),                           # c_fc
        w(ks[9], (H, N)),     w(ks[10], (1, N)),                          # mlp c_proj
    )

    out, _ = block_forward(x, params, n_heads)
    out = jax.block_until_ready(out)

    ref = block_reference(x, params, n_heads)
    assert out.shape == (B, T, N)
    assert bool(jnp.allclose(out, ref, rtol=1e-2, atol=1e-2)), "mismatch vs reference"

    print("KERNEL_OK")
</pallas_src>

<mosaic_0001>
module attributes {stable_mosaic.version = 11 : i64} {
  func.func @_block_kernel(%arg0: i32, %arg1: memref<2x128xf32, #tpu.memory_space<vmem>>, %arg2: memref<2x8x128xf32, #tpu.memory_space<vmem>>, %arg3: memref<1x128xf32, #tpu.memory_space<vmem>>, %arg4: memref<1x128xf32, #tpu.memory_space<vmem>>, %arg5: memref<128x128xbf16, #tpu.memory_space<vmem>>, %arg6: memref<1x128xf32, #tpu.memory_space<vmem>>, %arg7: memref<128x128xbf16, #tpu.memory_space<vmem>>, %arg8: memref<1x128xf32, #tpu.memory_space<vmem>>, %arg9: memref<1x128xf32, #tpu.memory_space<vmem>>, %arg10: memref<1x128xf32, #tpu.memory_space<vmem>>, %arg11: memref<128x512xbf16, #tpu.memory_space<vmem>>, %arg12: memref<1x512xf32, #tpu.memory_space<vmem>>, %arg13: memref<512x128xbf16, #tpu.memory_space<vmem>>, %arg14: memref<1x128xf32, #tpu.memory_space<vmem>>, %arg15: memref<2x8x128xf32, #tpu.memory_space<vmem>>) attributes {dimension_semantics = [#tpu.dimension_semantics<parallel>], iteration_bounds = array<i64: 1>, scalar_prefetch = 0 : i64, scratch_operands = 0 : i64, tpu.core_type = #tpu.core_type<tc>, window_params = [{pipeline_mode = #tpu.pipeline_mode<synchronous>, transform_indices = @transform_0, window_bounds = array<i64: 2, 128>}, {transform_indices = @transform_1, window_bounds = array<i64: 2, 8, 128>}, {pipeline_mode = #tpu.pipeline_mode<synchronous>, transform_indices = @transform_2, window_bounds = array<i64: 1, 128>}, {pipeline_mode = #tpu.pipeline_mode<synchronous>, transform_indices = @transform_3, window_bounds = array<i64: 1, 128>}, {pipeline_mode = #tpu.pipeline_mode<synchronous>, transform_indices = @transform_4, window_bounds = array<i64: 128, 128>}, {pipeline_mode = #tpu.pipeline_mode<synchronous>, transform_indices = @transform_5, window_bounds = array<i64: 1, 128>}, {pipeline_mode = #tpu.pipeline_mode<synchronous>, transform_indices = @transform_6, window_bounds = array<i64: 128, 128>}, {pipeline_mode = #tpu.pipeline_mode<synchronous>, transform_indices = @transform_7, window_bounds = array<i64: 1, 128>}, {pipeline_mode = #tpu.pipeline_mode<synchronous>, transform_indices = @transform_8, window_bounds = array<i64: 1, 128>}, {pipeline_mode = #tpu.pipeline_mode<synchronous>, transform_indices = @transform_9, window_bounds = array<i64: 1, 128>}, {pipeline_mode = #tpu.pipeline_mode<synchronous>, transform_indices = @transform_10, window_bounds = array<i64: 128, 512>}, {pipeline_mode = #tpu.pipeline_mode<synchronous>, transform_indices = @transform_11, window_bounds = array<i64: 1, 512>}, {pipeline_mode = #tpu.pipeline_mode<synchronous>, transform_indices = @transform_12, window_bounds = array<i64: 512, 128>}, {pipeline_mode = #tpu.pipeline_mode<synchronous>, transform_indices = @transform_13, window_bounds = array<i64: 1, 128>}, {transform_indices = @transform_14, window_bounds = array<i64: 2, 8, 128>}]} {
    %c0 = arith.constant 0 : index
    %c0_0 = arith.constant 0 : index
    %0 = vector.load %arg1[%c0, %c0_0] : memref<2x128xf32, #tpu.memory_space<vmem>>, vector<2x128xf32>
    %c0_1 = arith.constant 0 : index
    %c0_2 = arith.constant 0 : index
    %1 = vector.load %arg3[%c0_1, %c0_2] : memref<1x128xf32, #tpu.memory_space<vmem>>, vector<1x128xf32>
    %c0_3 = arith.constant 0 : index
    %c0_4 = arith.constant 0 : index
    %2 = vector.load %arg4[%c0_3, %c0_4] : memref<1x128xf32, #tpu.memory_space<vmem>>, vector<1x128xf32>
    %cst = arith.constant dense<0.000000e+00> : vector<2xf32>
    %3 = vector.multi_reduction <add>, %0, %cst [1] : vector<2x128xf32> to vector<2xf32>
    %4 = vector.shape_cast %3 : vector<2xf32> to vector<2x1xf32>
    %cst_5 = arith.constant 1.280000e+02 : f32
    %5 = vector.broadcast %cst_5 : f32 to vector<2x1xf32>
    %6 = arith.divf %4, %5 : vector<2x1xf32>
    %7 = vector.broadcast %6 : vector<2x1xf32> to vector<2x128xf32>
    %8 = arith.subf %0, %7 : vector<2x128xf32>
    %9 = arith.mulf %8, %8 : vector<2x128xf32>
    %cst_6 = arith.constant dense<0.000000e+00> : vector<2xf32>
    %10 = vector.multi_reduction <add>, %9, %cst_6 [1] : vector<2x128xf32> to vector<2xf32>
    %11 = vector.shape_cast %10 : vector<2xf32> to vector<2x1xf32>
    %cst_7 = arith.constant 1.280000e+02 : f32
    %12 = vector.broadcast %cst_7 : f32 to vector<2x1xf32>
    %13 = arith.divf %11, %12 : vector<2x1xf32>
    %cst_8 = arith.constant 9.99999974E-6 : f32
    %14 = vector.broadcast %cst_8 : f32 to vector<2x1xf32>
    %15 = arith.addf %13, %14 : vector<2x1xf32>
    %16 = math.rsqrt %15 : vector<2x1xf32>
    %17 = vector.broadcast %16 : vector<2x1xf32> to vector<2x128xf32>
    %18 = arith.mulf %8, %17 : vector<2x128xf32>
    %19 = vector.broadcast %1 : vector<1x128xf32> to vector<2x128xf32>
    %20 = arith.mulf %18, %19 : vector<2x128xf32>
    %21 = vector.broadcast %2 : vector<1x128xf32> to vector<2x128xf32>
    %22 = arith.addf %20, %21 : vector<2x128xf32>
    %23 = arith.truncf %22 : vector<2x128xf32> to vector<2x128xbf16>
    %c0_9 = arith.constant 0 : index
    %c0_10 = arith.constant 0 : index
    %24 = vector.load %arg5[%c0_9, %c0_10] : memref<128x128xbf16, #tpu.memory_space<vmem>>, vector<128x128xbf16>
    %cst_11 = arith.constant dense<0.000000e+00> : vector<2x128xf32>
    %25 = tpu.matmul %23, %24, %cst_11 {dimension_numbers = #tpu.dot_dimension_numbers<[1], [0], [0], [1], [0, 0, 1, 1], [], []>} : vector<2x128xbf16>, vector<128x128xbf16>, vector<2x128xf32> -> vector<2x128xf32>
    %c0_12 = arith.constant 0 : index
    %c0_13 = arith.constant 0 : index
    %26 = vector.load %arg6[%c0_12, %c0_13] : memref<1x128xf32, #tpu.memory_space<vmem>>, vector<1x128xf32>
    %27 = vector.broadcast %26 : vector<1x128xf32> to vector<2x128xf32>
    %28 = arith.addf %25, %27 : vector<2x128xf32>
    %29 = arith.truncf %28 : vector<2x128xf32> to vector<2x128xbf16>
    %c0_14 = arith.constant 0 : index
    %c0_15 = arith.constant 0 : index
    %30 = vector.load %arg7[%c0_14, %c0_15] : memref<128x128xbf16, #tpu.memory_space<vmem>>, vector<128x128xbf16>
    %cst_16 = arith.constant dense<0.000000e+00> : vector<2x128xf32>
    %31 = tpu.matmul %29, %30, %cst_16 {dimension_numbers = #tpu.dot_dimension_numbers<[1], [0], [0], [1], [0, 0, 1, 1], [], []>} : vector<2x128xbf16>, vector<128x128xbf16>, vector<2x128xf32> -> vector<2x128xf32>
    %c0_17 = arith.constant 0 : index
    %c0_18 = arith.constant 0 : index
    %32 = vector.load %arg8[%c0_17, %c0_18] : memref<1x128xf32, #tpu.memory_space<vmem>>, vector<1x128xf32>
    %33 = vector.broadcast %32 : vector<1x128xf32> to vector<2x128xf32>
    %34 = arith.addf %31, %33 : vector<2x128xf32>
    %c0_19 = arith.constant 0 : index
    %c0_20 = arith.constant 0 : index
    %c0_21 = arith.constant 0 : index
    %35 = vector.load %arg2[%c0_19, %c0_20, %c0_21] : memref<2x8x128xf32, #tpu.memory_space<vmem>>, vector<2x8x128xf32>
    %36 = vector.shape_cast %34 : vector<2x128xf32> to vector<2x1x128xf32>
    %37 = vector.broadcast %36 : vector<2x1x128xf32> to vector<2x8x128xf32>
    %38 = arith.addf %35, %37 : vector<2x8x128xf32>
    %39 = vector.shape_cast %38 : vector<2x8x128xf32> to vector<16x128xf32>
    %c0_22 = arith.constant 0 : index
    %c0_23 = arith.constant 0 : index
    %40 = vector.load %arg9[%c0_22, %c0_23] : memref<1x128xf32, #tpu.memory_space<vmem>>, vector<1x128xf32>
    %c0_24 = arith.constant 0 : index
    %c0_25 = arith.constant 0 : index
    %41 = vector.load %arg10[%c0_24, %c0_25] : memref<1x128xf32, #tpu.memory_space<vmem>>, vector<1x128xf32>
    %cst_26 = arith.constant dense<0.000000e+00> : vector<16xf32>
    %42 = vector.multi_reduction <add>, %39, %cst_26 [1] : vector<16x128xf32> to vector<16xf32>
    %43 = vector.shape_cast %42 : vector<16xf32> to vector<16x1xf32>
    %cst_27 = arith.constant 1.280000e+02 : f32
    %44 = vector.broadcast %cst_27 : f32 to vector<16x1xf32>
    %45 = arith.divf %43, %44 : vector<16x1xf32>
    %46 = vector.broadcast %45 : vector<16x1xf32> to vector<16x128xf32>
    %47 = arith.subf %39, %46 : vector<16x128xf32>
    %48 = arith.mulf %47, %47 : vector<16x128xf32>
    %cst_28 = arith.constant dense<0.000000e+00> : vector<16xf32>
    %49 = vector.multi_reduction <add>, %48, %cst_28 [1] : vector<16x128xf32> to vector<16xf32>
    %50 = vector.shape_cast %49 : vector<16xf32> to vector<16x1xf32>
    %cst_29 = arith.constant 1.280000e+02 : f32
    %51 = vector.broadcast %cst_29 : f32 to vector<16x1xf32>
    %52 = arith.divf %50, %51 : vector<16x1xf32>
    %cst_30 = arith.constant 9.99999974E-6 : f32
    %53 = vector.broadcast %cst_30 : f32 to vector<16x1xf32>
    %54 = arith.addf %52, %53 : vector<16x1xf32>
    %55 = math.rsqrt %54 : vector<16x1xf32>
    %56 = vector.broadcast %55 : vector<16x1xf32> to vector<16x128xf32>
    %57 = arith.mulf %47, %56 : vector<16x128xf32>
    %58 = vector.broadcast %40 : vector<1x128xf32> to vector<16x128xf32>
    %59 = arith.mulf %57, %58 : vector<16x128xf32>
    %60 = vector.broadcast %41 : vector<1x128xf32> to vector<16x128xf32>
    %61 = arith.addf %59, %60 : vector<16x128xf32>
    %62 = arith.truncf %61 : vector<16x128xf32> to vector<16x128xbf16>
    %c0_31 = arith.constant 0 : index
    %c0_32 = arith.constant 0 : index
    %63 = vector.load %arg11[%c0_31, %c0_32] : memref<128x512xbf16, #tpu.memory_space<vmem>>, vector<128x512xbf16>
    %cst_33 = arith.constant dense<0.000000e+00> : vector<16x512xf32>
    %64 = tpu.matmul %62, %63, %cst_33 {dimension_numbers = #tpu.dot_dimension_numbers<[1], [0], [0], [1], [0, 0, 1, 1], [], []>} : vector<16x128xbf16>, vector<128x512xbf16>, vector<16x512xf32> -> vector<16x512xf32>
    %c0_34 = arith.constant 0 : index
    %c0_35 = arith.constant 0 : index
    %65 = vector.load %arg12[%c0_34, %c0_35] : memref<1x512xf32, #tpu.memory_space<vmem>>, vector<1x512xf32>
    %66 = vector.broadcast %65 : vector<1x512xf32> to vector<16x512xf32>
    %67 = arith.addf %64, %66 : vector<16x512xf32>
    %cst_36 = arith.constant 5.000000e-01 : f32
    %68 = vector.broadcast %cst_36 : f32 to vector<16x512xf32>
    %69 = arith.mulf %68, %67 : vector<16x512xf32>
    %cst_37 = arith.constant 4.471500e-02 : f32
    %70 = vector.broadcast %cst_37 : f32 to vector<16x512xf32>
    %71 = arith.mulf %70, %67 : vector<16x512xf32>
    %72 = arith.mulf %71, %67 : vector<16x512xf32>
    %73 = arith.mulf %72, %67 : vector<16x512xf32>
    %74 = arith.addf %67, %73 : vector<16x512xf32>
    %cst_38 = arith.constant 0.797884583 : f32
    %75 = vector.broadcast %cst_38 : f32 to vector<16x512xf32>
    %76 = arith.mulf %75, %74 : vector<16x512xf32>
    %77 = math.tanh %76 : vector<16x512xf32>
    %cst_39 = arith.constant 1.000000e+00 : f32
    %78 = vector.broadcast %cst_39 : f32 to vector<16x512xf32>
    %79 = arith.addf %78, %77 : vector<16x512xf32>
    %80 = arith.mulf %69, %79 : vector<16x512xf32>
    %81 = arith.truncf %80 : vector<16x512xf32> to vector<16x512xbf16>
    %c0_40 = arith.constant 0 : index
    %c0_41 = arith.constant 0 : index
    %82 = vector.load %arg13[%c0_40, %c0_41] : memref<512x128xbf16, #tpu.memory_space<vmem>>, vector<512x128xbf16>
    %cst_42 = arith.constant dense<0.000000e+00> : vector<16x128xf32>
    %83 = tpu.matmul %81, %82, %cst_42 {dimension_numbers = #tpu.dot_dimension_numbers<[1], [0], [0], [1], [0, 0, 1, 1], [], []>} : vector<16x512xbf16>, vector<512x128xbf16>, vector<16x128xf32> -> vector<16x128xf32>
    %c0_43 = arith.constant 0 : index
    %c0_44 = arith.constant 0 : index
    %84 = vector.load %arg14[%c0_43, %c0_44] : memref<1x128xf32, #tpu.memory_space<vmem>>, vector<1x128xf32>
    %85 = vector.broadcast %84 : vector<1x128xf32> to vector<16x128xf32>
    %86 = arith.addf %83, %85 : vector<16x128xf32>
    %87 = vector.shape_cast %86 : vector<16x128xf32> to vector<2x8x128xf32>
    %88 = arith.addf %38, %87 : vector<2x8x128xf32>
    %c0_45 = arith.constant 0 : index
    %c0_46 = arith.constant 0 : index
    %c0_47 = arith.constant 0 : index
    %89 = vector.load %arg15[%c0_45, %c0_46, %c0_47] : memref<2x8x128xf32, #tpu.memory_space<vmem>>, vector<2x8x128xf32>
    tpu.vector_store %arg15[%c0_45, %c0_46, %c0_47], %88 {strides = array<i32>} : memref<2x8x128xf32, #tpu.memory_space<vmem>>, vector<2x8x128xf32>,
    return
  }
  func.func @transform_0(%arg0: i32) -> (i32, i32) {
    %c0_i32 = arith.constant 0 : i32
    %c0_i32_0 = arith.constant 0 : i32
    %c0_i32_1 = arith.constant 0 : i32
    return %c0_i32, %c0_i32_0 : i32, i32
  }
  func.func @transform_1(%arg0: i32) -> (i32, i32, i32) {
    %c0_i32 = arith.constant 0 : i32
    %c0_i32_0 = arith.constant 0 : i32
    %c0_i32_1 = arith.constant 0 : i32
    return %c0_i32, %arg0, %c0_i32_0 : i32, i32, i32
  }
  func.func @transform_2(%arg0: i32) -> (i32, i32) {
    %c0_i32 = arith.constant 0 : i32
    %c0_i32_0 = arith.constant 0 : i32
    %c0_i32_1 = arith.constant 0 : i32
    return %c0_i32, %c0_i32_0 : i32, i32
  }
  func.func @transform_3(%arg0: i32) -> (i32, i32) {
    %c0_i32 = arith.constant 0 : i32
    %c0_i32_0 = arith.constant 0 : i32
    %c0_i32_1 = arith.constant 0 : i32
    return %c0_i32, %c0_i32_0 : i32, i32
  }
  func.func @transform_4(%arg0: i32) -> (i32, i32) {
    %c0_i32 = arith.constant 0 : i32
    %c0_i32_0 = arith.constant 0 : i32
    %c0_i32_1 = arith.constant 0 : i32
    return %c0_i32, %c0_i32_0 : i32, i32
  }
  func.func @transform_5(%arg0: i32) -> (i32, i32) {
    %c0_i32 = arith.constant 0 : i32
    %c0_i32_0 = arith.constant 0 : i32
    %c0_i32_1 = arith.constant 0 : i32
    return %c0_i32, %c0_i32_0 : i32, i32
  }
  func.func @transform_6(%arg0: i32) -> (i32, i32) {
    %c0_i32 = arith.constant 0 : i32
    %c0_i32_0 = arith.constant 0 : i32
    %c0_i32_1 = arith.constant 0 : i32
    return %c0_i32, %c0_i32_0 : i32, i32
  }
  func.func @transform_7(%arg0: i32) -> (i32, i32) {
    %c0_i32 = arith.constant 0 : i32
    %c0_i32_0 = arith.constant 0 : i32
    %c0_i32_1 = arith.constant 0 : i32
    return %c0_i32, %c0_i32_0 : i32, i32
  }
  func.func @transform_8(%arg0: i32) -> (i32, i32) {
    %c0_i32 = arith.constant 0 : i32
    %c0_i32_0 = arith.constant 0 : i32
    %c0_i32_1 = arith.constant 0 : i32
    return %c0_i32, %c0_i32_0 : i32, i32
  }
  func.func @transform_9(%arg0: i32) -> (i32, i32) {
    %c0_i32 = arith.constant 0 : i32
    %c0_i32_0 = arith.constant 0 : i32
    %c0_i32_1 = arith.constant 0 : i32
    return %c0_i32, %c0_i32_0 : i32, i32
  }
  func.func @transform_10(%arg0: i32) -> (i32, i32) {
    %c0_i32 = arith.constant 0 : i32
    %c0_i32_0 = arith.constant 0 : i32
    %c0_i32_1 = arith.constant 0 : i32
    return %c0_i32, %c0_i32_0 : i32, i32
  }
  func.func @transform_11(%arg0: i32) -> (i32, i32) {
    %c0_i32 = arith.constant 0 : i32
    %c0_i32_0 = arith.constant 0 : i32
    %c0_i32_1 = arith.constant 0 : i32
    return %c0_i32, %c0_i32_0 : i32, i32
  }
  func.func @transform_12(%arg0: i32) -> (i32, i32) {
    %c0_i32 = arith.constant 0 : i32
    %c0_i32_0 = arith.constant 0 : i32
    %c0_i32_1 = arith.constant 0 : i32
    return %c0_i32, %c0_i32_0 : i32, i32
  }
  func.func @transform_13(%arg0: i32) -> (i32, i32) {
    %c0_i32 = arith.constant 0 : i32
    %c0_i32_0 = arith.constant 0 : i32
    %c0_i32_1 = arith.constant 0 : i32
    return %c0_i32, %c0_i32_0 : i32, i32
  }
  func.func @transform_14(%arg0: i32) -> (i32, i32, i32) {
    %c0_i32 = arith.constant 0 : i32
    %c0_i32_0 = arith.constant 0 : i32
    %c0_i32_1 = arith.constant 0 : i32
    return %c0_i32, %arg0, %c0_i32_0 : i32, i32, i32
  }
}

</mosaic_0001>

<llo_original>
// kernel: tpu_custom_call.1
$region0: #{tpu_custom_call.1}
  #allocation0 [shape = 'u32[]', space=smem, size = 0x4, offset = 0x4, fixed_abs, tag = 'smem constant byte address 0x4 - core index']
  #allocation1 [shape = 'u32[144,128]{1,0:T(1,128)}', space=vmem, size = 0x12000, scoped, tag = 'internal scratch']
  %s0 = inlined_call_operand.hbm [shape: f32[2,128], index: 0, kind: input, shape index: {}]
  %s1 = inlined_call_operand.hbm [shape: f32[2,8,128], index: 1, kind: input, shape index: {}]
  %s2 = inlined_call_operand.vmem [shape: f32[1,128], index: 2, kind: input, shape index: {}]
  %s3 = inlined_call_operand.vmem [shape: f32[1,128], index: 3, kind: input, shape index: {}]
  %s4 = inlined_call_operand.hbm [shape: bf16[128,128], index: 4, kind: input, shape index: {}]
  %s5 = inlined_call_operand.vmem [shape: f32[1,128], index: 5, kind: input, shape index: {}]
  %s6 = inlined_call_operand.hbm [shape: bf16[128,128], index: 6, kind: input, shape index: {}]
  %s7 = inlined_call_operand.vmem [shape: f32[1,128], index: 7, kind: input, shape index: {}]
  %s8 = inlined_call_operand.vmem [shape: f32[1,128], index: 8, kind: input, shape index: {}]
  %s9 = inlined_call_operand.vmem [shape: f32[1,128], index: 9, kind: input, shape index: {}]
  %s10 = inlined_call_operand.hbm [shape: bf16[128,512], index: 10, kind: input, shape index: {}]
  %s11 = inlined_call_operand.vmem [shape: f32[1,512], index: 11, kind: input, shape index: {}]
  %s12 = inlined_call_operand.hbm [shape: bf16[512,128], index: 12, kind: input, shape index: {}]
  %s13 = inlined_call_operand.vmem [shape: f32[1,128], index: 13, kind: input, shape index: {}]
  %s14 = inlined_call_operand.hbm [shape: f32[2,8,128], index: 14, kind: output, shape index: {}]
  %s15 = sld [smem:[#allocation0]]
  $region90: #{tpu_custom_call.1} parent=0
    _
  %s17 = ssub.s32 1, %s15
  %s18 = scalar_select 0, %s17, %s15
  $region1: #{tpu_custom_call.1} parent=0
    #allocation2 [shape = 'u8[1024]{0}', space=vmem, size = 0x400, scoped, tag = 'input window, operand 0, single buffered']
    #allocation3 [shape = 's32[1]{0}', space=sflag, size = 0x4, scoped, tag = 'scoped memory for tpu_custom_call.1']
    #allocation4 [shape = 's32[1]{0}', space=sflag, size = 0x4, scoped, tag = 'scoped memory for tpu_custom_call.1']
    #allocation5 [shape = 'u8[8192]{0}', space=vmem, size = 0x2000, scoped, tag = 'input window, operand 1, single buffered']
    #allocation6 [shape = 's32[1]{0}', space=sflag, size = 0x4, scoped, tag = 'scoped memory for tpu_custom_call.1']
    #allocation7 [shape = 'u8[32768]{0}', space=vmem, size = 0x8000, scoped, tag = 'input window, operand 4, single buffered']
    #allocation8 [shape = 'u8[32768]{0}', space=vmem, size = 0x8000, scoped, tag = 'input window, operand 6, single buffered']
    #allocation9 [shape = 's32[1]{0}', space=sflag, size = 0x4, scoped, tag = 'scoped memory for tpu_custom_call.1']
    #allocation10 [shape = 'u8[131072]{0}', space=vmem, size = 0x20000, scoped, tag = 'input window, operand 10, single buffered']
    #allocation11 [shape = 'u8[131072]{0}', space=vmem, size = 0x20000, scoped, tag = 'input window, operand 12, single buffered']
    #allocation12 [shape = 's32[1]{0}', space=sflag, size = 0x4, scoped, tag = 'scoped memory for tpu_custom_call.1']
    #allocation13 [shape = 'u8[8192]{0}', space=vmem, size = 0x2000, scoped, tag = 'output window, operand 0, single buffered']
    %19 = vsyncpa [#allocation3], 0
    %20 = vsyncpa [#allocation6], 0
    %21 = vsyncpa [#allocation9], 0
    %22 = vsyncpa [#allocation12], 0
    %23 = vsyncpa [#allocation4], 0
    // Predicated region
    $region2: #{tpu_custom_call.1} parent=1 // pred_check
      _
    $region3: #{tpu_custom_call.1} parent=1 // pred_check_branch
      %25 = sbr.rel (0) target = $region5
    $region4: #{tpu_custom_call.1} parent=1 // pred_region
      %s27 = ssub.s32 32, 32
      %28 = vsyncadd [#allocation3], %s27
      %s30 = sshll.u32 [#allocation2], 4
      %s31 = int_to_ptr.vmem [resolvable:$true] %s30
      %33 = dma.hbm_to_vmem [thread:$0]  %s0, 32, %s31, [#allocation3]
    $region5: #{tpu_custom_call.1} parent=1 // pred_fallthru
      _
    // Predicated region
    $region6: #{tpu_custom_call.1} parent=1 // pred_check
      _
    $region7: #{tpu_custom_call.1} parent=1 // pred_check_branch
      %35 = sbr.rel (0) target = $region9
    $region8: #{tpu_custom_call.1} parent=1 // pred_region
      %s37 = ssub.s32 256, 256
      %38 = vsyncadd [#allocation6], %s37
      %s39 = sshll.u32 [#allocation5], 4
      %s40 = int_to_ptr.vmem [resolvable:$true] %s39
      %45 = dma.hbm_to_vmem [thread:$0]  %s1, 256, %s40, [#allocation6], 128, 128, 8
    $region9: #{tpu_custom_call.1} parent=1 // pred_fallthru
      _
    // Predicated region
    $region10: #{tpu_custom_call.1} parent=1 // pred_check
      _
    $region11: #{tpu_custom_call.1} parent=1 // pred_check_branch
      %47 = sbr.rel (0) target = $region13
    $region12: #{tpu_custom_call.1} parent=1 // pred_region
      _
    $region13: #{tpu_custom_call.1} parent=1 // pred_fallthru
      _
    // Predicated region
    $region14: #{tpu_custom_call.1} parent=1 // pred_check
      _
    $region15: #{tpu_custom_call.1} parent=1 // pred_check_branch
      %49 = sbr.rel (0) target = $region17
    $region16: #{tpu_custom_call.1} parent=1 // pred_region
      _
    $region17: #{tpu_custom_call.1} parent=1 // pred_fallthru
      _
    // Predicated region
    $region18: #{tpu_custom_call.1} parent=1 // pred_check
      _
    $region19: #{tpu_custom_call.1} parent=1 // pred_check_branch
      %51 = sbr.rel (0) target = $region21
    $region20: #{tpu_custom_call.1} parent=1 // pred_region
      %s53 = ssub.s32 1024, 1024
      %54 = vsyncadd [#allocation6], %s53
      %s55 = sshll.u32 [#allocation7], 4
      %s56 = int_to_ptr.vmem [resolvable:$true] %s55
      %61 = dma.hbm_to_vmem [thread:$0]  %s4, 1024, %s56, [#allocation6], 64, 64, 4
    $region21: #{tpu_custom_call.1} parent=1 // pred_fallthru
      _
    // Predicated region
    $region22: #{tpu_custom_call.1} parent=1 // pred_check
      _
    $region23: #{tpu_custom_call.1} parent=1 // pred_check_branch
      %63 = sbr.rel (0) target = $region25
    $region24: #{tpu_custom_call.1} parent=1 // pred_region
      _
    $region25: #{tpu_custom_call.1} parent=1 // pred_fallthru
      _
    // Predicated region
    $region26: #{tpu_custom_call.1} parent=1 // pred_check
      _
    $region27: #{tpu_custom_call.1} parent=1 // pred_check_branch
      %65 = sbr.rel (0) target = $region29
    $region28: #{tpu_custom_call.1} parent=1 // pred_region
      %s67 = ssub.s32 1024, 1024
      %68 = vsyncadd [#allocation9], %s67
      %s69 = sshll.u32 [#allocation8], 4
      %s70 = int_to_ptr.vmem [resolvable:$true] %s69
      %75 = dma.hbm_to_vmem [thread:$0]  %s6, 1024, %s70, [#allocation9], 64, 64, 4
    $region29: #{tpu_custom_call.1} parent=1 // pred_fallthru
      _
    // Predicated region
    $region30: #{tpu_custom_call.1} parent=1 // pred_check
      _
    $region31: #{tpu_custom_call.1} parent=1 // pred_check_branch
      %77 = sbr.rel (0) target = $region33
    $region32: #{tpu_custom_call.1} parent=1 // pred_region
      _
    $region33: #{tpu_custom_call.1} parent=1 // pred_fallthru
      _
    // Predicated region
    $region34: #{tpu_custom_call.1} parent=1 // pred_check
      _
    $region35: #{tpu_custom_call.1} parent=1 // pred_check_branch
      %79 = sbr.rel (0) target = $region37
    $region36: #{tpu_custom_call.1} parent=1 // pred_region
      _
    $region37: #{tpu_custom_call.1} parent=1 // pred_fallthru
      _
    // Predicated region
    $region38: #{tpu_custom_call.1} parent=1 // pred_check
      _
    $region39: #{tpu_custom_call.1} parent=1 // pred_check_branch
      %81 = sbr.rel (0) target = $region41
    $region40: #{tpu_custom_call.1} parent=1 // pred_region
      _
    $region41: #{tpu_custom_call.1} parent=1 // pred_fallthru
      _
    // Predicated region
    $region42: #{tpu_custom_call.1} parent=1 // pred_check
      _
    $region43: #{tpu_custom_call.1} parent=1 // pred_check_branch
      %83 = sbr.rel (0) target = $region45
    $region44: #{tpu_custom_call.1} parent=1 // pred_region
      %s85 = ssub.s32 4096, 4096
      %86 = vsyncadd [#allocation9], %s85
      %s87 = sshll.u32 [#allocation10], 4
      %s88 = int_to_ptr.vmem [resolvable:$true] %s87
      %93 = dma.hbm_to_vmem [thread:$0]  %s10, 4096, %s88, [#allocation9], 256, 256, 16
    $region45: #{tpu_custom_call.1} parent=1 // pred_fallthru
      _
    // Predicated region
    $region46: #{tpu_custom_call.1} parent=1 // pred_check
      _
    $region47: #{tpu_custom_call.1} parent=1 // pred_check_branch
      %95 = sbr.rel (0) target = $region49
    $region48: #{tpu_custom_call.1} parent=1 // pred_region
      _
    $region49: #{tpu_custom_call.1} parent=1 // pred_fallthru
      _
    // Predicated region
    $region50: #{tpu_custom_call.1} parent=1 // pred_check
      _
    $region51: #{tpu_custom_call.1} parent=1 // pred_check_branch
      %97 = sbr.rel (0) target = $region53
    $region52: #{tpu_custom_call.1} parent=1 // pred_region
      %s99 = ssub.s32 4096, 4096
      %100 = vsyncadd [#allocation12], %s99
      %s101 = sshll.u32 [#allocation11], 4
      %s102 = int_to_ptr.vmem [resolvable:$true] %s101
      %107 = dma.hbm_to_vmem [thread:$0]  %s12, 4096, %s102, [#allocation12], 64, 64, 4
    $region53: #{tpu_custom_call.1} parent=1 // pred_fallthru
      _
    // Predicated region
    $region54: #{tpu_custom_call.1} parent=1 // pred_check
      _
    $region55: #{tpu_custom_call.1} parent=1 // pred_check_branch
      %109 = sbr.rel (0) target = $region57
    $region56: #{tpu_custom_call.1} parent=1 // pred_region
      _
    $region57: #{tpu_custom_call.1} parent=1 // pred_fallthru
      _
    // Predicated region
    $region58: #{tpu_custom_call.1} parent=1 // pred_check
      _
    $region59: #{tpu_custom_call.1} parent=1 // pred_check_branch
      %111 = sbr.rel (0) target = $region61
    $region60: #{tpu_custom_call.1} parent=1 // pred_region
      %112 = dma.done [#allocation3], 32
    $region61: #{tpu_custom_call.1} parent=1 // pred_fallthru
      _
    // Predicated region
    $region62: #{tpu_custom_call.1} parent=1 // pred_check
      _
    $region63: #{tpu_custom_call.1} parent=1 // pred_check_branch
      %114 = sbr.rel (0) target = $region65
    $region64: #{tpu_custom_call.1} parent=1 // pred_region
      %115 = dma.done [#allocation6], 256
    $region65: #{tpu_custom_call.1} parent=1 // pred_fallthru
      _
    // Predicated region
    $region66: #{tpu_custom_call.1} parent=1 // pred_check
      _
    $region67: #{tpu_custom_call.1} parent=1 // pred_check_branch
      %117 = sbr.rel (0) target = $region69
    $region68: #{tpu_custom_call.1} parent=1 // pred_region
      %118 = dma.done [#allocation6], 1024
    $region69: #{tpu_custom_call.1} parent=1 // pred_fallthru
      _
    // Predicated region
    $region70: #{tpu_custom_call.1} parent=1 // pred_check
      _
    $region71: #{tpu_custom_call.1} parent=1 // pred_check_branch
      %120 = sbr.rel (0) target = $region73
    $region72: #{tpu_custom_call.1} parent=1 // pred_region
      %121 = dma.done [#allocation9], 1024
    $region73: #{tpu_custom_call.1} parent=1 // pred_fallthru
      _
    // Predicated region
    $region74: #{tpu_custom_call.1} parent=1 // pred_check
      _
    $region75: #{tpu_custom_call.1} parent=1 // pred_check_branch
      %123 = sbr.rel (0) target = $region77
    $region76: #{tpu_custom_call.1} parent=1 // pred_region
      %124 = dma.done [#allocation9], 4096
    $region77: #{tpu_custom_call.1} parent=1 // pred_fallthru
      _
    // Predicated region
    $region78: #{tpu_custom_call.1} parent=1 // pred_check
      _
    $region79: #{tpu_custom_call.1} parent=1 // pred_check_branch
      %126 = sbr.rel (0) target = $region81
    $region80: #{tpu_custom_call.1} parent=1 // pred_region
      %127 = dma.done [#allocation12], 4096
    $region81: #{tpu_custom_call.1} parent=1 // pred_fallthru
      _
    %v129 = vld [vmem:[#allocation2] sm:$0x3]
    %v130 = vld [vmem:[%s2] sm:$0x1]
    %v131 = vld [vmem:[%s3] sm:$0x1]
    %vm132 = vcmask 1041408
    %v133 = vsel %vm132, %v129, 0.0
    %134 = vadd.xlane.f32.xlu0 %v133
    %v135 = vpop.xlane.xlu0 %134
    %v136 = vrcp.pop 128.0
    %v137 = vmul.f32 %v135, %v136
    %v138 = vsub.f32 %v129, %v137
    %v139 = vmul.f32 %v138, %v138
    %v140 = vsel %vm132, %v139, 0.0
    %141 = vadd.xlane.f32.xlu0 %v140
    %v142 = vpop.xlane.xlu0 %141
    %v143 = vmul.f32 %v142, %v136
    %v144 = vadd.f32 %v143, 1e-05
    %v145 = vrsqrt.pop %v144
    %v146 = vmul.f32 %v138, %v145
    %v148 = vlaneseq
    %v149 = vshrl.u32 %v148, 7
    %v150 = vsub.s32 0, %v149
    %v151 = vrot.slane %v130, %v150
    %v153 = vmul.f32 %v146, %v151
    %v155 = vlaneseq
    %v156 = vshrl.u32 %v155, 7
    %v157 = vsub.s32 0, %v156
    %v158 = vrot.slane %v131, %v157
    %v160 = vadd.f32 %v153, %v158
    %v161 = vpack.c.bf16 %v160, %v160
    %v162 = vld [vmem:[#allocation7] sm:$0xf]
    %v163 = vld [vmem:[#allocation7 + $0x4] sm:$0xf]
    %v164 = vld [vmem:[#allocation7 + $0x8] sm:$0xf]
    %v165 = vld [vmem:[#allocation7 + $0xc] sm:$0xf]
    %v166 = vld [vmem:[#allocation7 + $0x10] sm:$0xf]
    %v167 = vld [vmem:[#allocation7 + $0x14] sm:$0xf]
    %v168 = vld [vmem:[#allocation7 + $0x18] sm:$0xf]
    %v169 = vld [vmem:[#allocation7 + $0x1c] sm:$0xf]
    %v170 = vld [vmem:[#allocation7 + $0x20] sm:$0xf]
    %v171 = vld [vmem:[#allocation7 + $0x24] sm:$0xf]
    %v172 = vld [vmem:[#allocation7 + $0x28] sm:$0xf]
    %v173 = vld [vmem:[#allocation7 + $0x2c] sm:$0xf]
    %v174 = vld [vmem:[#allocation7 + $0x30] sm:$0xf]
    %v175 = vld [vmem:[#allocation7 + $0x34] sm:$0xf]
    %v176 = vld [vmem:[#allocation7 + $0x38] sm:$0xf]
    %v177 = vld [vmem:[#allocation7 + $0x3c] sm:$0xf]
    %v178 = vld [vmem:[%s5] sm:$0x1]
    %v180 = vlaneseq
    %v181 = vshrl.u32 %v180, 7
    %v182 = vsub.s32 0, %v181
    %v183 = vrot.slane %v178, %v182
    %v201 = vunpack.c.l.b16 %v162
    %v202 = vunpack.c.l.b16 %v163
    %v203 = vunpack.c.l.b16 %v164
    %v204 = vunpack.c.l.b16 %v165
    %v205 = vunpack.c.l.b16 %v166
    %v206 = vunpack.c.l.b16 %v167
    %v207 = vunpack.c.l.b16 %v168
    %v208 = vunpack.c.l.b16 %v169
    %v209 = vunpack.c.l.b16 %v170
    %v210 = vunpack.c.l.b16 %v171
    %v211 = vunpack.c.l.b16 %v172
    %v212 = vunpack.c.l.b16 %v173
    %v213 = vunpack.c.l.b16 %v174
    %v214 = vunpack.c.l.b16 %v175
    %v215 = vunpack.c.l.b16 %v176
    %v216 = vunpack.c.l.b16 %v177
    %v217 = vpack.c.b16 %v202, %v201
    %v218 = vpack.c.b16 %v204, %v203
    %v219 = vpack.c.b16 %v206, %v205
    %v220 = vpack.c.b16 %v208, %v207
    %v221 = vpack.c.b16 %v210, %v209
    %v222 = vpack.c.b16 %v212, %v211
    %v223 = vpack.c.b16 %v214, %v213
    %v224 = vpack.c.b16 %v216, %v215
    %233 = vmatprep.subr.bf16.mxu0 0
    %234 = vmatpush1.bf16.msra.mxu0 %v217
    %235 = vmatprep.subr.bf16.mxu0 0
    %236 = vmatpush1.bf16.msra.mxu0 %v218
    %237 = vmatprep.subr.bf16.mxu0 0
    %238 = vmatpush1.bf16.msra.mxu0 %v219
    %239 = vmatprep.subr.bf16.mxu0 0
    %240 = vmatpush1.bf16.msra.mxu0 %v220
    %241 = vmatprep.subr.bf16.mxu0 0
    %242 = vmatpush1.bf16.msra.mxu0 %v221
    %243 = vmatprep.subr.bf16.mxu0 0
    %244 = vmatpush1.bf16.msra.mxu0 %v222
    %245 = vmatprep.subr.bf16.mxu0 0
    %246 = vmatpush1.bf16.msra.mxu0 %v223
    %247 = vmatprep.subr.bf16.mxu0 0
    %248 = vmatpush1.bf16.msra.mxu0 %v224
    %249 = vmatprep.subr.bf16.mxu0 0
    %250 = vmatpush1.bf16.msra.mxu0 0
    %251 = vmatprep.subr.bf16.mxu0 0
    %252 = vmatpush1.bf16.msra.mxu0 0
    %253 = vmatprep.subr.bf16.mxu0 0
    %254 = vmatpush1.bf16.msra.mxu0 0
    %255 = vmatprep.subr.bf16.mxu0 0
    %256 = vmatpush1.bf16.msra.mxu0 0
    %257 = vmatprep.subr.bf16.mxu0 0
    %258 = vmatpush1.bf16.msra.mxu0 0
    %259 = vmatprep.subr.bf16.mxu0 0
    %260 = vmatpush1.bf16.msra.mxu0 0
    %261 = vmatprep.subr.bf16.mxu0 0
    %262 = vmatpush1.bf16.msra.mxu0 0
    %263 = vmatprep.subr.bf16.mxu0 0
    %264 = vmatpush1.bf16.msra.mxu0 0
    %265 = vmatprep.mubr.bf16.mxu0 0
    %266 = vmatmul.mubr.bf16.gmra.mrb[0].mxu0 %v161
    %v267 = vpop.f32.mrb[0].mxu0
    %v268 = vadd.f32 %v183, %v267
    %v269 = vpop.f32.mrb[0].mxu0
    %v270 = vpop.f32.mrb[0].mxu0
    %v271 = vpop.f32.mrb[0].mxu0
    %272 = vdwg.mxu0
    %v273 = vpack.c.bf16 %v268, %v268
    %v274 = vld [vmem:[#allocation8] sm:$0xf]
    %v275 = vld [vmem:[#allocation8 + $0x4] sm:$0xf]
    %v276 = vld [vmem:[#allocation8 + $0x8] sm:$0xf]
    %v277 = vld [vmem:[#allocation8 + $0xc] sm:$0xf]
    %v278 = vld [vmem:[#allocation8 + $0x10] sm:$0xf]
    %v279 = vld [vmem:[#allocation8 + $0x14] sm:$0xf]
    %v280 = vld [vmem:[#allocation8 + $0x18] sm:$0xf]
    %v281 = vld [vmem:[#allocation8 + $0x1c] sm:$0xf]
    %v282 = vld [vmem:[#allocation8 + $0x20] sm:$0xf]
    %v283 = vld [vmem:[#allocation8 + $0x24] sm:$0xf]
    %v284 = vld [vmem:[#allocation8 + $0x28] sm:$0xf]
    %v285 = vld [vmem:[#allocation8 + $0x2c] sm:$0xf]
    %v286 = vld [vmem:[#allocation8 + $0x30] sm:$0xf]
    %v287 = vld [vmem:[#allocation8 + $0x34] sm:$0xf]
    %v288 = vld [vmem:[#allocation8 + $0x38] sm:$0xf]
    %v289 = vld [vmem:[#allocation8 + $0x3c] sm:$0xf]
    %v290 = vld [vmem:[%s7] sm:$0x1]
    %v292 = vlaneseq
    %v293 = vshrl.u32 %v292, 7
    %v294 = vsub.s32 0, %v293
    %v295 = vrot.slane %v290, %v294
    %v313 = vunpack.c.l.b16 %v274
    %v314 = vunpack.c.l.b16 %v275
    %v315 = vunpack.c.l.b16 %v276
    %v316 = vunpack.c.l.b16 %v277
    %v317 = vunpack.c.l.b16 %v278
    %v318 = vunpack.c.l.b16 %v279
    %v319 = vunpack.c.l.b16 %v280
    %v320 = vunpack.c.l.b16 %v281
    %v321 = vunpack.c.l.b16 %v282
    %v322 = vunpack.c.l.b16 %v283
    %v323 = vunpack.c.l.b16 %v284
    %v324 = vunpack.c.l.b16 %v285
    %v325 = vunpack.c.l.b16 %v286
    %v326 = vunpack.c.l.b16 %v287
    %v327 = vunpack.c.l.b16 %v288
    %v328 = vunpack.c.l.b16 %v289
    %v329 = vpack.c.b16 %v314, %v313
    %v330 = vpack.c.b16 %v316, %v315
    %v331 = vpack.c.b16 %v318, %v317
    %v332 = vpack.c.b16 %v320, %v319
    %v333 = vpack.c.b16 %v322, %v321
    %v334 = vpack.c.b16 %v324, %v323
    %v335 = vpack.c.b16 %v326, %v325
    %v336 = vpack.c.b16 %v328, %v327
    %345 = vmatprep.subr.bf16.mxu0 0
    %346 = vmatpush1.bf16.msra.mxu0 %v329
    %347 = vmatprep.subr.bf16.mxu0 0
    %348 = vmatpush1.bf16.msra.mxu0 %v330
    %349 = vmatprep.subr.bf16.mxu0 0
    %350 = vmatpush1.bf16.msra.mxu0 %v331
    %351 = vmatprep.subr.bf16.mxu0 0
    %352 = vmatpush1.bf16.msra.mxu0 %v332
    %353 = vmatprep.subr.bf16.mxu0 0
    %354 = vmatpush1.bf16.msra.mxu0 %v333
    %355 = vmatprep.subr.bf16.mxu0 0
    %356 = vmatpush1.bf16.msra.mxu0 %v334
    %357 = vmatprep.subr.bf16.mxu0 0
    %358 = vmatpush1.bf16.msra.mxu0 %v335
    %359 = vmatprep.subr.bf16.mxu0 0
    %360 = vmatpush1.bf16.msra.mxu0 %v336
    %361 = vmatprep.subr.bf16.mxu0 0
    %362 = vmatpush1.bf16.msra.mxu0 0
    %363 = vmatprep.subr.bf16.mxu0 0
    %364 = vmatpush1.bf16.msra.mxu0 0
    %365 = vmatprep.subr.bf16.mxu0 0
    %366 = vmatpush1.bf16.msra.mxu0 0
    %367 = vmatprep.subr.bf16.mxu0 0
    %368 = vmatpush1.bf16.msra.mxu0 0
    %369 = vmatprep.subr.bf16.mxu0 0
    %370 = vmatpush1.bf16.msra.mxu0 0
    %371 = vmatprep.subr.bf16.mxu0 0
    %372 = vmatpush1.bf16.msra.mxu0 0
    %373 = vmatprep.subr.bf16.mxu0 0
    %374 = vmatpush1.bf16.msra.mxu0 0
    %375 = vmatprep.subr.bf16.mxu0 0
    %376 = vmatpush1.bf16.msra.mxu0 0
    %377 = vmatprep.mubr.bf16.mxu0 0
    %378 = vmatmul.mubr.bf16.gmra.mrb[0].mxu0 %v273
    %v379 = vpop.f32.mrb[0].mxu0
    %v380 = vadd.f32 %v295, %v379
    %v381 = vpop.f32.mrb[0].mxu0
    %v382 = vpop.f32.mrb[0].mxu0
    %v383 = vpop.f32.mrb[0].mxu0
    %384 = vdwg.mxu0
    %v385 = vld [vmem:[#allocation5] sm:$0xff]
    %v386 = vld [vmem:[#allocation5 + $0x8] sm:$0xff]
    %v389 = vunpack.c.l.s4 1966171168
    %v390 = vunpack.c.0.s8 %v389
    %v391 = vlaneseq
    %v392 = vshrl.u32 %v391, 7
    %v393 = vsub.s32 %v390, %v392
    %v394 = vrot.slane %v380, %v393
    %v395 = vcombine.high %v394, %v394
    %v397 = vunpack.c.l.s4 1966171168
    %v398 = vunpack.c.0.s8 %v397
    %v399 = vlaneseq
    %v400 = vshrl.u32 %v399, 7
    %v401 = vsub.s32 %v398, %v400
    %v402 = vrot.slane %v394, %v401
    %v404 = vunpack.c.l.s4 1966171168
    %v405 = vunpack.c.0.s8 %v404
    %v406 = vlaneseq
    %v407 = vshrl.u32 %v406, 7
    %v408 = vsub.s32 %v405, %v407
    %v409 = vrot.slane %v395, %v408
    %v410 = vlaneseq
    %v411 = vshrl.u32 %v410, 7
    %v412 = vsub.s32 0, %v411
    %v413 = vrot.slane %v402, %v412
    %v414 = vlaneseq
    %v415 = vshrl.u32 %v414, 7
    %v416 = vsub.s32 0, %v415
    %v417 = vrot.slane %v409, %v416
    %v420 = vadd.f32 %v385, %v413
    %v421 = vadd.f32 %v386, %v417
    %v422 = vld [vmem:[%s8] sm:$0x1]
    %v423 = vld [vmem:[%s9] sm:$0x1]
    %424 = vadd.xlane.f32.xlu0 %v420
    %v425 = vpop.xlane.xlu0 %424
    %426 = vadd.xlane.f32.xlu0 %v421
    %v427 = vpop.xlane.xlu0 %426
    %v428 = vmul.f32 %v425, %v136
    %v429 = vmul.f32 %v427, %v136
    %v430 = vsub.f32 %v420, %v428
    %v431 = vsub.f32 %v421, %v429
    %v432 = vmul.f32 %v430, %v430
    %v433 = vmul.f32 %v431, %v431
    %434 = vadd.xlane.f32.xlu0 %v432
    %v435 = vpop.xlane.xlu0 %434
    %436 = vadd.xlane.f32.xlu0 %v433
    %v437 = vpop.xlane.xlu0 %436
    %v438 = vmul.f32 %v435, %v136
    %v439 = vmul.f32 %v437, %v136
    %v440 = vadd.f32 %v438, 1e-05
    %v441 = vadd.f32 %v439, 1e-05
    %v442 = vrsqrt.pop %v440
    %v443 = vrsqrt.pop %v441
    %v444 = vmul.f32 %v430, %v442
    %v445 = vmul.f32 %v431, %v443
    %v447 = vlaneseq
    %v448 = vshrl.u32 %v447, 7
    %v449 = vsub.s32 0, %v448
    %v450 = vrot.slane %v422, %v449
    %v452 = vmul.f32 %v444, %v450
    %v453 = vmul.f32 %v445, %v450
    %v455 = vlaneseq
    %v456 = vshrl.u32 %v455, 7
    %v457 = vsub.s32 0, %v456
    %v458 = vrot.slane %v423, %v457
    %v460 = vadd.f32 %v452, %v458
    %v461 = vadd.f32 %v453, %v458
    %v462 = vpack.c.bf16 %v461, %v460
    %v463 = vld [vmem:[#allocation10] sm:$0xff]
    %v464 = vld [vmem:[#allocation10 + $0x8] sm:$0xff]
    %v465 = vld [vmem:[#allocation10 + $0x10] sm:$0xff]
    %v466 = vld [vmem:[#allocation10 + $0x18] sm:$0xff]
    %v467 = vld [vmem:[#allocation10 + $0x20] sm:$0xff]
    %v468 = vld [vmem:[#allocation10 + $0x28] sm:$0xff]
    %v469 = vld [vmem:[#allocation10 + $0x30] sm:$0xff]
    %v470 = vld [vmem:[#allocation10 + $0x38] sm:$0xff]
    %v471 = vld [vmem:[#allocation10 + $0x40] sm:$0xff]
    %v472 = vld [vmem:[#allocation10 + $0x48] sm:$0xff]
    %v473 = vld [vmem:[#allocation10 + $0x50] sm:$0xff]
    %v474 = vld [vmem:[#allocation10 + $0x58] sm:$0xff]
    %v475 = vld [vmem:[#allocation10 + $0x60] sm:$0xff]
    %v476 = vld [vmem:[#allocation10 + $0x68] sm:$0xff]
    %v477 = vld [vmem:[#allocation10 + $0x70] sm:$0xff]
    %v478 = vld [vmem:[#allocation10 + $0x78] sm:$0xff]
    %v479 = vld [vmem:[#allocation10 + $0x80] sm:$0xff]
    %v480 = vld [vmem:[#allocation10 + $0x88] sm:$0xff]
    %v481 = vld [vmem:[#allocation10 + $0x90] sm:$0xff]
    %v482 = vld [vmem:[#allocation10 + $0x98] sm:$0xff]
    %v483 = vld [vmem:[#allocation10 + $0xa0] sm:$0xff]
    %v484 = vld [vmem:[#allocation10 + $0xa8] sm:$0xff]
    %v485 = vld [vmem:[#allocation10 + $0xb0] sm:$0xff]
    %v486 = vld [vmem:[#allocation10 + $0xb8] sm:$0xff]
    %v487 = vld [vmem:[#allocation10 + $0xc0] sm:$0xff]
    %v488 = vld [vmem:[#allocation10 + $0xc8] sm:$0xff]
    %v489 = vld [vmem:[#allocation10 + $0xd0] sm:$0xff]
    %v490 = vld [vmem:[#allocation10 + $0xd8] sm:$0xff]
    %v491 = vld [vmem:[#allocation10 + $0xe0] sm:$0xff]
    %v492 = vld [vmem:[#allocation10 + $0xe8] sm:$0xff]
    %v493 = vld [vmem:[#allocation10 + $0xf0] sm:$0xff]
    %v494 = vld [vmem:[#allocation10 + $0xf8] sm:$0xff]
    %v495 = vld [vmem:[%s11] sm:$0xf]
    %v497 = vlaneseq
    %v498 = vshrl.u32 %v497, 7
    %v499 = vsub.s32 0, %v498
    %v500 = vrot.slane %v495, %v499
    %v501 = vlaneseq
    %v502 = vshrl.u32 %v501, 7
    %v503 = vsub.s32 1, %v502
    %v504 = vrot.slane %v495, %v503
    %v505 = vlaneseq
    %v506 = vshrl.u32 %v505, 7
    %v507 = vsub.s32 2, %v506
    %v508 = vrot.slane %v495, %v507
    %v509 = vlaneseq
    %v510 = vshrl.u32 %v509, 7
    %v511 = vsub.s32 3, %v510
    %v512 = vrot.slane %v495, %v511
    %v549 = vunpack.c.l.b16 %v463
    %v550 = vunpack.c.h.b16 %v463
    %v551 = vunpack.c.l.b16 %v464
    %v552 = vunpack.c.h.b16 %v464
    %v553 = vunpack.c.l.b16 %v465
    %v554 = vunpack.c.h.b16 %v465
    %v555 = vunpack.c.l.b16 %v466
    %v556 = vunpack.c.h.b16 %v466
    %v557 = vunpack.c.l.b16 %v467
    %v558 = vunpack.c.h.b16 %v467
    %v559 = vunpack.c.l.b16 %v468
    %v560 = vunpack.c.h.b16 %v468
    %v561 = vunpack.c.l.b16 %v469
    %v562 = vunpack.c.h.b16 %v469
    %v563 = vunpack.c.l.b16 %v470
    %v564 = vunpack.c.h.b16 %v470
    %v565 = vunpack.c.l.b16 %v471
    %v566 = vunpack.c.h.b16 %v471
    %v567 = vunpack.c.l.b16 %v472
    %v568 = vunpack.c.h.b16 %v472
    %v569 = vunpack.c.l.b16 %v473
    %v570 = vunpack.c.h.b16 %v473
    %v571 = vunpack.c.l.b16 %v474
    %v572 = vunpack.c.h.b16 %v474
    %v573 = vunpack.c.l.b16 %v475
    %v574 = vunpack.c.h.b16 %v475
    %v575 = vunpack.c.l.b16 %v476
    %v576 = vunpack.c.h.b16 %v476
    %v577 = vunpack.c.l.b16 %v477
    %v578 = vunpack.c.h.b16 %v477
    %v579 = vunpack.c.l.b16 %v478
    %v580 = vunpack.c.h.b16 %v478
    %v581 = vunpack.c.l.b16 %v479
    %v582 = vunpack.c.h.b16 %v479
    %v583 = vunpack.c.l.b16 %v480
    %v584 = vunpack.c.h.b16 %v480
    %v585 = vunpack.c.l.b16 %v481
    %v586 = vunpack.c.h.b16 %v481
    %v587 = vunpack.c.l.b16 %v482
    %v588 = vunpack.c.h.b16 %v482
    %v589 = vunpack.c.l.b16 %v483
    %v590 = vunpack.c.h.b16 %v483
    %v591 = vunpack.c.l.b16 %v484
    %v592 = vunpack.c.h.b16 %v484
    %v593 = vunpack.c.l.b16 %v485
    %v594 = vunpack.c.h.b16 %v485
    %v595 = vunpack.c.l.b16 %v486
    %v596 = vunpack.c.h.b16 %v486
    %v597 = vunpack.c.l.b16 %v487
    %v598 = vunpack.c.h.b16 %v487
    %v599 = vunpack.c.l.b16 %v488
    %v600 = vunpack.c.h.b16 %v488
    %v601 = vunpack.c.l.b16 %v489
    %v602 = vunpack.c.h.b16 %v489
    %v603 = vunpack.c.l.b16 %v490
    %v604 = vunpack.c.h.b16 %v490
    %v605 = vunpack.c.l.b16 %v491
    %v606 = vunpack.c.h.b16 %v491
    %v607 = vunpack.c.l.b16 %v492
    %v608 = vunpack.c.h.b16 %v492
    %v609 = vunpack.c.l.b16 %v493
    %v610 = vunpack.c.h.b16 %v493
    %v611 = vunpack.c.l.b16 %v494
    %v612 = vunpack.c.h.b16 %v494
    %v613 = vpack.c.b16 %v553, %v549
    %v614 = vpack.c.b16 %v554, %v550
    %v615 = vpack.c.b16 %v555, %v551
    %v616 = vpack.c.b16 %v556, %v552
    %v617 = vpack.c.b16 %v561, %v557
    %v618 = vpack.c.b16 %v562, %v558
    %v619 = vpack.c.b16 %v563, %v559
    %v620 = vpack.c.b16 %v564, %v560
    %v621 = vpack.c.b16 %v569, %v565
    %v622 = vpack.c.b16 %v570, %v566
    %v623 = vpack.c.b16 %v571, %v567
    %v624 = vpack.c.b16 %v572, %v568
    %v625 = vpack.c.b16 %v577, %v573
    %v626 = vpack.c.b16 %v578, %v574
    %v627 = vpack.c.b16 %v579, %v575
    %v628 = vpack.c.b16 %v580, %v576
    %v629 = vpack.c.b16 %v585, %v581
    %v630 = vpack.c.b16 %v586, %v582
    %v631 = vpack.c.b16 %v587, %v583
    %v632 = vpack.c.b16 %v588, %v584
    %v633 = vpack.c.b16 %v593, %v589
    %v634 = vpack.c.b16 %v594, %v590
    %v635 = vpack.c.b16 %v595, %v591
    %v636 = vpack.c.b16 %v596, %v592
    %v637 = vpack.c.b16 %v601, %v597
    %v638 = vpack.c.b16 %v602, %v598
    %v639 = vpack.c.b16 %v603, %v599
    %v640 = vpack.c.b16 %v604, %v600
    %v641 = vpack.c.b16 %v609, %v605
    %v642 = vpack.c.b16 %v610, %v606
    %v643 = vpack.c.b16 %v611, %v607
    %v644 = vpack.c.b16 %v612, %v608
    %677 = vmatprep.subr.bf16.mxu0 %v614
    %678 = vmatpush1.bf16.msra.mxu0 %v613
    %679 = vmatprep.subr.bf16.mxu0 %v618
    %680 = vmatpush1.bf16.msra.mxu0 %v617
    %681 = vmatprep.subr.bf16.mxu0 %v622
    %682 = vmatpush1.bf16.msra.mxu0 %v621
    %683 = vmatprep.subr.bf16.mxu0 %v626
    %684 = vmatpush1.bf16.msra.mxu0 %v625
    %685 = vmatprep.subr.bf16.mxu0 %v630
    %686 = vmatpush1.bf16.msra.mxu0 %v629
    %687 = vmatprep.subr.bf16.mxu0 %v634
    %688 = vmatpush1.bf16.msra.mxu0 %v633
    %689 = vmatprep.subr.bf16.mxu0 %v638
    %690 = vmatpush1.bf16.msra.mxu0 %v637
    %691 = vmatprep.subr.bf16.mxu0 %v642
    %692 = vmatpush1.bf16.msra.mxu0 %v641
    %693 = vmatprep.subr.bf16.mxu0 0
    %694 = vmatpush1.bf16.msra.mxu0 0
    %695 = vmatprep.subr.bf16.mxu0 0
    %696 = vmatpush1.bf16.msra.mxu0 0
    %697 = vmatprep.subr.bf16.mxu0 0
    %698 = vmatpush1.bf16.msra.mxu0 0
    %699 = vmatprep.subr.bf16.mxu0 0
    %700 = vmatpush1.bf16.msra.mxu0 0
    %701 = vmatprep.subr.bf16.mxu0 0
    %702 = vmatpush1.bf16.msra.mxu0 0
    %703 = vmatprep.subr.bf16.mxu0 0
    %704 = vmatpush1.bf16.msra.mxu0 0
    %705 = vmatprep.subr.bf16.mxu0 0
    %706 = vmatpush1.bf16.msra.mxu0 0
    %707 = vmatprep.subr.bf16.mxu0 0
    %708 = vmatpush1.bf16.msra.mxu0 0
    %709 = vmatprep.mubr.bf16.mxu0 0
    %710 = vmatmul.mubr.bf16.gmra.mrb[0].mxu0 %v462
    %v711 = vpop.f32.mrb[0].mxu0
    %v712 = vadd.f32 %v500, %v711
    %v713 = vpop.f32.mrb[0].mxu0
    %v714 = vadd.f32 %v504, %v713
    %v715 = vpop.f32.mrb[0].mxu0
    %v716 = vadd.f32 %v500, %v715
    %v717 = vpop.f32.mrb[0].mxu0
    %v718 = vadd.f32 %v504, %v717
    %719 = vdwg.mxu0
    %720 = vmatprep.subr.bf16.mxu0 %v616
    %721 = vmatpush1.bf16.msra.mxu0 %v615
    %722 = vmatprep.subr.bf16.mxu0 %v620
    %723 = vmatpush1.bf16.msra.mxu0 %v619
    %724 = vmatprep.subr.bf16.mxu0 %v624
    %725 = vmatpush1.bf16.msra.mxu0 %v623
    %726 = vmatprep.subr.bf16.mxu0 %v628
    %727 = vmatpush1.bf16.msra.mxu0 %v627
    %728 = vmatprep.subr.bf16.mxu0 %v632
    %729 = vmatpush1.bf16.msra.mxu0 %v631
    %730 = vmatprep.subr.bf16.mxu0 %v636
    %731 = vmatpush1.bf16.msra.mxu0 %v635
    %732 = vmatprep.subr.bf16.mxu0 %v640
    %733 = vmatpush1.bf16.msra.mxu0 %v639
    %734 = vmatprep.subr.bf16.mxu0 %v644
    %735 = vmatpush1.bf16.msra.mxu0 %v643
    %736 = vmatprep.subr.bf16.mxu0 0
    %737 = vmatpush1.bf16.msra.mxu0 0
    %738 = vmatprep.subr.bf16.mxu0 0
    %739 = vmatpush1.bf16.msra.mxu0 0
    %740 = vmatprep.subr.bf16.mxu0 0
    %741 = vmatpush1.bf16.msra.mxu0 0
    %742 = vmatprep.subr.bf16.mxu0 0
    %743 = vmatpush1.bf16.msra.mxu0 0
    %744 = vmatprep.subr.bf16.mxu0 0
    %745 = vmatpush1.bf16.msra.mxu0 0
    %746 = vmatprep.subr.bf16.mxu0 0
    %747 = vmatpush1.bf16.msra.mxu0 0
    %748 = vmatprep.subr.bf16.mxu0 0
    %749 = vmatpush1.bf16.msra.mxu0 0
    %750 = vmatprep.subr.bf16.mxu0 0
    %751 = vmatpush1.bf16.msra.mxu0 0
    %752 = vmatprep.mubr.bf16.mxu0 0
    %753 = vmatmul.mubr.bf16.gmra.mrb[0].mxu0 %v462
    %v754 = vpop.f32.mrb[0].mxu0
    %v755 = vadd.f32 %v508, %v754
    %v756 = vpop.f32.mrb[0].mxu0
    %v757 = vadd.f32 %v512, %v756
    %v758 = vpop.f32.mrb[0].mxu0
    %v759 = vadd.f32 %v508, %v758
    %v760 = vpop.f32.mrb[0].mxu0
    %v761 = vadd.f32 %v512, %v760
    %762 = vdwg.mxu0
    %v763 = vmul.f32 %v712, 0.5
    %v764 = vmul.f32 %v714, 0.5
    %v765 = vmul.f32 %v755, 0.5
    %v766 = vmul.f32 %v757, 0.5
    %v767 = vmul.f32 %v716, 0.5
    %v768 = vmul.f32 %v718, 0.5
    %v769 = vmul.f32 %v759, 0.5
    %v770 = vmul.f32 %v761, 0.5
    %v771 = vmul.f32 %v712, 0.044715
    %v772 = vmul.f32 %v714, 0.044715
    %v773 = vmul.f32 %v755, 0.044715
    %v774 = vmul.f32 %v757, 0.044715
    %v775 = vmul.f32 %v716, 0.044715
    %v776 = vmul.f32 %v718, 0.044715
    %v777 = vmul.f32 %v759, 0.044715
    %v778 = vmul.f32 %v761, 0.044715
    %v779 = vmul.f32 %v771, %v712
    %v780 = vmul.f32 %v772, %v714
    %v781 = vmul.f32 %v773, %v755
    %v782 = vmul.f32 %v774, %v757
    %v783 = vmul.f32 %v775, %v716
    %v784 = vmul.f32 %v776, %v718
    %v785 = vmul.f32 %v777, %v759
    %v786 = vmul.f32 %v778, %v761
    %v787 = vmul.f32 %v779, %v712
    %v788 = vmul.f32 %v780, %v714
    %v789 = vmul.f32 %v781, %v755
    %v790 = vmul.f32 %v782, %v757
    %v791 = vmul.f32 %v783, %v716
    %v792 = vmul.f32 %v784, %v718
    %v793 = vmul.f32 %v785, %v759
    %v794 = vmul.f32 %v786, %v761
    %v795 = vadd.f32 %v712, %v787
    %v796 = vadd.f32 %v714, %v788
    %v797 = vadd.f32 %v755, %v789
    %v798 = vadd.f32 %v757, %v790
    %v799 = vadd.f32 %v716, %v791
    %v800 = vadd.f32 %v718, %v792
    %v801 = vadd.f32 %v759, %v793
    %v802 = vadd.f32 %v761, %v794
    %v803 = vmul.f32 %v795, 0.7978846
    %v804 = vmul.f32 %v796, 0.7978846
    %v805 = vmul.f32 %v797, 0.7978846
    %v806 = vmul.f32 %v798, 0.7978846
    %v807 = vmul.f32 %v799, 0.7978846
    %v808 = vmul.f32 %v800, 0.7978846
    %v809 = vmul.f32 %v801, 0.7978846
    %v810 = vmul.f32 %v802, 0.7978846
    %v811 = vtanh.pop %v803
    %v812 = vtanh.pop %v804
    %v813 = vtanh.pop %v805
    %v814 = vtanh.pop %v806
    %v815 = vtanh.pop %v807
    %v816 = vtanh.pop %v808
    %v817 = vtanh.pop %v809
    %v818 = vtanh.pop %v810
    %v819 = vadd.f32 %v811, 1.0
    %v820 = vadd.f32 %v812, 1.0
    %v821 = vadd.f32 %v813, 1.0
    %v822 = vadd.f32 %v814, 1.0
    %v823 = vadd.f32 %v815, 1.0
    %v824 = vadd.f32 %v816, 1.0
    %v825 = vadd.f32 %v817, 1.0
    %v826 = vadd.f32 %v818, 1.0
    %v827 = vmul.f32 %v763, %v819
    %v828 = vmul.f32 %v764, %v820
    %v829 = vmul.f32 %v765, %v821
    %v830 = vmul.f32 %v766, %v822
    %v831 = vmul.f32 %v767, %v823
    %v832 = vmul.f32 %v768, %v824
    %v833 = vmul.f32 %v769, %v825
    %v834 = vmul.f32 %v770, %v826
    %v835 = vpack.c.bf16 %v831, %v827
    %v836 = vpack.c.bf16 %v832, %v828
    %v837 = vpack.c.bf16 %v833, %v829
    %v838 = vpack.c.bf16 %v834, %v830
    %v839 = vld [vmem:[#allocation11] sm:$0xf]
    %v840 = vld [vmem:[#allocation11 + $0x4] sm:$0xf]
    %v841 = vld [vmem:[#allocation11 + $0x8] sm:$0xf]
    %v842 = vld [vmem:[#allocation11 + $0xc] sm:$0xf]
    %v843 = vld [vmem:[#allocation11 + $0x10] sm:$0xf]
    %v844 = vld [vmem:[#allocation11 + $0x14] sm:$0xf]
    %v845 = vld [vmem:[#allocation11 + $0x18] sm:$0xf]
    %v846 = vld [vmem:[#allocation11 + $0x1c] sm:$0xf]
    %v847 = vld [vmem:[#allocation11 + $0x20] sm:$0xf]
    %v848 = vld [vmem:[#allocation11 + $0x24] sm:$0xf]
    %v849 = vld [vmem:[#allocation11 + $0x28] sm:$0xf]
    %v850 = vld [vmem:[#allocation11 + $0x2c] sm:$0xf]
    %v851 = vld [vmem:[#allocation11 + $0x30] sm:$0xf]
    %v852 = vld [vmem:[#allocation11 + $0x34] sm:$0xf]
    %v853 = vld [vmem:[#allocation11 + $0x38] sm:$0xf]
    %v854 = vld [vmem:[#allocation11 + $0x3c] sm:$0xf]
    %v855 = vld [vmem:[#allocation11 + $0x40] sm:$0xf]
    %v856 = vld [vmem:[#allocation11 + $0x44] sm:$0xf]
    %v857 = vld [vmem:[#allocation11 + $0x48] sm:$0xf]
    %v858 = vld [vmem:[#allocation11 + $0x4c] sm:$0xf]
    %v859 = vld [vmem:[#allocation11 + $0x50] sm:$0xf]
    %v860 = vld [vmem:[#allocation11 + $0x54] sm:$0xf]
    %v861 = vld [vmem:[#allocation11 + $0x58] sm:$0xf]
    %v862 = vld [vmem:[#allocation11 + $0x5c] sm:$0xf]
    %v863 = vld [vmem:[#allocation11 + $0x60] sm:$0xf]
    %v864 = vld [vmem:[#allocation11 + $0x64] sm:$0xf]
    %v865 = vld [vmem:[#allocation11 + $0x68] sm:$0xf]
    %v866 = vld [vmem:[#allocation11 + $0x6c] sm:$0xf]
    %v867 = vld [vmem:[#allocation11 + $0x70] sm:$0xf]
    %v868 = vld [vmem:[#allocation11 + $0x74] sm:$0xf]
    %v869 = vld [vmem:[#allocation11 + $0x78] sm:$0xf]
    %v870 = vld [vmem:[#allocation11 + $0x7c] sm:$0xf]
    %v871 = vld [vmem:[#allocation11 + $0x80] sm:$0xf]
    %v872 = vld [vmem:[#allocation11 + $0x84] sm:$0xf]
    %v873 = vld [vmem:[#allocation11 + $0x88] sm:$0xf]
    %v874 = vld [vmem:[#allocation11 + $0x8c] sm:$0xf]
    %v875 = vld [vmem:[#allocation11 + $0x90] sm:$0xf]
    %v876 = vld [vmem:[#allocation11 + $0x94] sm:$0xf]
    %v877 = vld [vmem:[#allocation11 + $0x98] sm:$0xf]
    %v878 = vld [vmem:[#allocation11 + $0x9c] sm:$0xf]
    %v879 = vld [vmem:[#allocation11 + $0xa0] sm:$0xf]
    %v880 = vld [vmem:[#allocation11 + $0xa4] sm:$0xf]
    %v881 = vld [vmem:[#allocation11 + $0xa8] sm:$0xf]
    %v882 = vld [vmem:[#allocation11 + $0xac] sm:$0xf]
    %v883 = vld [vmem:[#allocation11 + $0xb0] sm:$0xf]
    %v884 = vld [vmem:[#allocation11 + $0xb4] sm:$0xf]
    %v885 = vld [vmem:[#allocation11 + $0xb8] sm:$0xf]
    %v886 = vld [vmem:[#allocation11 + $0xbc] sm:$0xf]
    %v887 = vld [vmem:[#allocation11 + $0xc0] sm:$0xf]
    %v888 = vld [vmem:[#allocation11 + $0xc4] sm:$0xf]
    %v889 = vld [vmem:[#allocation11 + $0xc8] sm:$0xf]
    %v890 = vld [vmem:[#allocation11 + $0xcc] sm:$0xf]
    %v891 = vld [vmem:[#allocation11 + $0xd0] sm:$0xf]
    %v892 = vld [vmem:[#allocation11 + $0xd4] sm:$0xf]
    %v893 = vld [vmem:[#allocation11 + $0xd8] sm:$0xf]
    %v894 = vld [vmem:[#allocation11 + $0xdc] sm:$0xf]
    %v895 = vld [vmem:[#allocation11 + $0xe0] sm:$0xf]
    %v896 = vld [vmem:[#allocation11 + $0xe4] sm:$0xf]
    %v897 = vld [vmem:[#allocation11 + $0xe8] sm:$0xf]
    %v898 = vld [vmem:[#allocation11 + $0xec] sm:$0xf]
    %v899 = vld [vmem:[#allocation11 + $0xf0] sm:$0xf]
    %v900 = vld [vmem:[#allocation11 + $0xf4] sm:$0xf]
    %v901 = vld [vmem:[#allocation11 + $0xf8] sm:$0xf]
    %v902 = vld [vmem:[#allocation11 + $0xfc] sm:$0xf]
    %v903 = vld [vmem:[%s13] sm:$0x1]
    %v905 = vlaneseq
    %v906 = vshrl.u32 %v905, 7
    %v907 = vsub.s32 0, %v906
    %v908 = vrot.slane %v903, %v907
    %v974 = vunpack.c.l.b16 %v839
    %v975 = vunpack.c.l.b16 %v840
    %v976 = vunpack.c.l.b16 %v841
    %v977 = vunpack.c.l.b16 %v842
    %v978 = vunpack.c.l.b16 %v843
    %v979 = vunpack.c.l.b16 %v844
    %v980 = vunpack.c.l.b16 %v845
    %v981 = vunpack.c.l.b16 %v846
    %v982 = vunpack.c.l.b16 %v847
    %v983 = vunpack.c.l.b16 %v848
    %v984 = vunpack.c.l.b16 %v849
    %v985 = vunpack.c.l.b16 %v850
    %v986 = vunpack.c.l.b16 %v851
    %v987 = vunpack.c.l.b16 %v852
    %v988 = vunpack.c.l.b16 %v853
    %v989 = vunpack.c.l.b16 %v854
    %v990 = vunpack.c.l.b16 %v855
    %v991 = vunpack.c.l.b16 %v856
    %v992 = vunpack.c.l.b16 %v857
    %v993 = vunpack.c.l.b16 %v858
    %v994 = vunpack.c.l.b16 %v859
    %v995 = vunpack.c.l.b16 %v860
    %v996 = vunpack.c.l.b16 %v861
    %v997 = vunpack.c.l.b16 %v862
    %v998 = vunpack.c.l.b16 %v863
    %v999 = vunpack.c.l.b16 %v864
    %v1000 = vunpack.c.l.b16 %v865
    %v1001 = vunpack.c.l.b16 %v866
    %v1002 = vunpack.c.l.b16 %v867
    %v1003 = vunpack.c.l.b16 %v868
    %v1004 = vunpack.c.l.b16 %v869
    %v1005 = vunpack.c.l.b16 %v870
    %v1006 = vunpack.c.l.b16 %v871
    %v1007 = vunpack.c.l.b16 %v872
    %v1008 = vunpack.c.l.b16 %v873
    %v1009 = vunpack.c.l.b16 %v874
    %v1010 = vunpack.c.l.b16 %v875
    %v1011 = vunpack.c.l.b16 %v876
    %v1012 = vunpack.c.l.b16 %v877
    %v1013 = vunpack.c.l.b16 %v878
    %v1014 = vunpack.c.l.b16 %v879
    %v1015 = vunpack.c.l.b16 %v880
    %v1016 = vunpack.c.l.b16 %v881
    %v1017 = vunpack.c.l.b16 %v882
    %v1018 = vunpack.c.l.b16 %v883
    %v1019 = vunpack.c.l.b16 %v884
    %v1020 = vunpack.c.l.b16 %v885
    %v1021 = vunpack.c.l.b16 %v886
    %v1022 = vunpack.c.l.b16 %v887
    %v1023 = vunpack.c.l.b16 %v888
    %v1024 = vunpack.c.l.b16 %v889
    %v1025 = vunpack.c.l.b16 %v890
    %v1026 = vunpack.c.l.b16 %v891
    %v1027 = vunpack.c.l.b16 %v892
    %v1028 = vunpack.c.l.b16 %v893
    %v1029 = vunpack.c.l.b16 %v894
    %v1030 = vunpack.c.l.b16 %v895
    %v1031 = vunpack.c.l.b16 %v896
    %v1032 = vunpack.c.l.b16 %v897
    %v1033 = vunpack.c.l.b16 %v898
    %v1034 = vunpack.c.l.b16 %v899
    %v1035 = vunpack.c.l.b16 %v900
    %v1036 = vunpack.c.l.b16 %v901
    %v1037 = vunpack.c.l.b16 %v902
    %v1038 = vpack.c.b16 %v975, %v974
    %v1039 = vpack.c.b16 %v977, %v976
    %v1040 = vpack.c.b16 %v979, %v978
    %v1041 = vpack.c.b16 %v981, %v980
    %v1042 = vpack.c.b16 %v983, %v982
    %v1043 = vpack.c.b16 %v985, %v984
    %v1044 = vpack.c.b16 %v987, %v986
    %v1045 = vpack.c.b16 %v989, %v988
    %v1046 = vpack.c.b16 %v991, %v990
    %v1047 = vpack.c.b16 %v993, %v992
    %v1048 = vpack.c.b16 %v995, %v994
    %v1049 = vpack.c.b16 %v997, %v996
    %v1050 = vpack.c.b16 %v999, %v998
    %v1051 = vpack.c.b16 %v1001, %v1000
    %v1052 = vpack.c.b16 %v1003, %v1002
    %v1053 = vpack.c.b16 %v1005, %v1004
    %v1054 = vpack.c.b16 %v1007, %v1006
    %v1055 = vpack.c.b16 %v1009, %v1008
    %v1056 = vpack.c.b16 %v1011, %v1010
    %v1057 = vpack.c.b16 %v1013, %v1012
    %v1058 = vpack.c.b16 %v1015, %v1014
    %v1059 = vpack.c.b16 %v1017, %v1016
    %v1060 = vpack.c.b16 %v1019, %v1018
    %v1061 = vpack.c.b16 %v1021, %v1020
    %v1062 = vpack.c.b16 %v1023, %v1022
    %v1063 = vpack.c.b16 %v1025, %v1024
    %v1064 = vpack.c.b16 %v1027, %v1026
    %v1065 = vpack.c.b16 %v1029, %v1028
    %v1066 = vpack.c.b16 %v1031, %v1030
    %v1067 = vpack.c.b16 %v1033, %v1032
    %v1068 = vpack.c.b16 %v1035, %v1034
    %v1069 = vpack.c.b16 %v1037, %v1036
    %1102 = vmatprep.subr.bf16.mxu0 0
    %1103 = vmatpush1.bf16.msra.mxu0 %v1038
    %1104 = vmatprep.subr.bf16.mxu0 0
    %1105 = vmatpush1.bf16.msra.mxu0 %v1039
    %1106 = vmatprep.subr.bf16.mxu0 0
    %1107 = vmatpush1.bf16.msra.mxu0 %v1040
    %1108 = vmatprep.subr.bf16.mxu0 0
    %1109 = vmatpush1.bf16.msra.mxu0 %v1041
    %1110 = vmatprep.subr.bf16.mxu0 0
    %1111 = vmatpush1.bf16.msra.mxu0 %v1042
    %1112 = vmatprep.subr.bf16.mxu0 0
    %1113 = vmatpush1.bf16.msra.mxu0 %v1043
    %1114 = vmatprep.subr.bf16.mxu0 0
    %1115 = vmatpush1.bf16.msra.mxu0 %v1044
    %1116 = vmatprep.subr.bf16.mxu0 0
    %1117 = vmatpush1.bf16.msra.mxu0 %v1045
    %1118 = vmatprep.subr.bf16.mxu0 0
    %1119 = vmatpush1.bf16.msra.mxu0 %v1046
    %1120 = vmatprep.subr.bf16.mxu0 0
    %1121 = vmatpush1.bf16.msra.mxu0 %v1047
    %1122 = vmatprep.subr.bf16.mxu0 0
    %1123 = vmatpush1.bf16.msra.mxu0 %v1048
    %1124 = vmatprep.subr.bf16.mxu0 0
    %1125 = vmatpush1.bf16.msra.mxu0 %v1049
    %1126 = vmatprep.subr.bf16.mxu0 0
    %1127 = vmatpush1.bf16.msra.mxu0 %v1050
    %1128 = vmatprep.subr.bf16.mxu0 0
    %1129 = vmatpush1.bf16.msra.mxu0 %v1051
    %1130 = vmatprep.subr.bf16.mxu0 0
    %1131 = vmatpush1.bf16.msra.mxu0 %v1052
    %1132 = vmatprep.subr.bf16.mxu0 0
    %1133 = vmatpush1.bf16.msra.mxu0 %v1053
    %1134 = vmatprep.mubr.bf16.mxu0 %v836
    %1135 = vmatmul.mubr.bf16.gmra.mrb[0].mxu0 %v835
    %v1136 = vpop.f32.mrb[0].mxu0
    %v1137 = vadd.f32 %v908, %v1136
    %v1138 = vpop.f32.mrb[0].mxu0
    %v1139 = vpop.f32.mrb[0].mxu0
    %v1140 = vadd.f32 %v908, %v1139
    %v1141 = vpop.f32.mrb[0].mxu0
    %1142 = vdwg.mxu0
    %1143 = vmatprep.subr.bf16.mxu0 0
    %1144 = vmatpush1.bf16.msra.mxu0 %v1054
    %1145 = vmatprep.subr.bf16.mxu0 0
    %1146 = vmatpush1.bf16.msra.mxu0 %v1055
    %1147 = vmatprep.subr.bf16.mxu0 0
    %1148 = vmatpush1.bf16.msra.mxu0 %v1056
    %1149 = vmatprep.subr.bf16.mxu0 0
    %1150 = vmatpush1.bf16.msra.mxu0 %v1057
    %1151 = vmatprep.subr.bf16.mxu0 0
    %1152 = vmatpush1.bf16.msra.mxu0 %v1058
    %1153 = vmatprep.subr.bf16.mxu0 0
    %1154 = vmatpush1.bf16.msra.mxu0 %v1059
    %1155 = vmatprep.subr.bf16.mxu0 0
    %1156 = vmatpush1.bf16.msra.mxu0 %v1060
    %1157 = vmatprep.subr.bf16.mxu0 0
    %1158 = vmatpush1.bf16.msra.mxu0 %v1061
    %1159 = vmatprep.subr.bf16.mxu0 0
    %1160 = vmatpush1.bf16.msra.mxu0 %v1062
    %1161 = vmatprep.subr.bf16.mxu0 0
    %1162 = vmatpush1.bf16.msra.mxu0 %v1063
    %1163 = vmatprep.subr.bf16.mxu0 0
    %1164 = vmatpush1.bf16.msra.mxu0 %v1064
    %1165 = vmatprep.subr.bf16.mxu0 0
    %1166 = vmatpush1.bf16.msra.mxu0 %v1065
    %1167 = vmatprep.subr.bf16.mxu0 0
    %1168 = vmatpush1.bf16.msra.mxu0 %v1066
    %1169 = vmatprep.subr.bf16.mxu0 0
    %1170 = vmatpush1.bf16.msra.mxu0 %v1067
    %1171 = vmatprep.subr.bf16.mxu0 0
    %1172 = vmatpush1.bf16.msra.mxu0 %v1068
    %1173 = vmatprep.subr.bf16.mxu0 0
    %1174 = vmatpush1.bf16.msra.mxu0 %v1069
    %1175 = vmatprep.mubr.bf16.mxu0 %v838
    %1176 = vmatmul.mubr.bf16.gmra.mrb[0].mxu0 %v837
    %v1177 = vpop.f32.mrb[0].mxu0
    %v1178 = vadd.f32 %v1137, %v1177
    %v1179 = vpop.f32.mrb[0].mxu0
    %v1180 = vpop.f32.mrb[0].mxu0
    %v1181 = vadd.f32 %v1140, %v1180
    %v1182 = vpop.f32.mrb[0].mxu0
    %1183 = vdwg.mxu0
    %v1184 = vadd.f32 %v420, %v1178
    %v1185 = vadd.f32 %v421, %v1181
    %1186 = vst [vmem:[#allocation13] sm:$0xff] %v1184
    %1187 = vst [vmem:[#allocation13 + $0x8] sm:$0xff] %v1185
    // Predicated region
    $region82: #{tpu_custom_call.1} parent=1 // pred_check
      _
    $region83: #{tpu_custom_call.1} parent=1 // pred_check_branch
      %1189 = sbr.rel (0) target = $region85
    $region84: #{tpu_custom_call.1} parent=1 // pred_region
      %s1191 = ssub.s32 256, 256
      %1192 = vsyncadd [#allocation4], %s1191
      %s1193 = sshll.u32 [#allocation13], 4
      %s1194 = int_to_ptr.vmem [resolvable:$true] %s1193
      %1199 = dma.vmem_to_hbm [thread:$0]  %s1194, 256, %s14, [#allocation4], 128, 128, 8
    $region85: #{tpu_custom_call.1} parent=1 // pred_fallthru
      _
    // Predicated region
    $region86: #{tpu_custom_call.1} parent=1 // pred_check
      _
    $region87: #{tpu_custom_call.1} parent=1 // pred_check_branch
      %1201 = sbr.rel (0) target = $region89
    $region88: #{tpu_custom_call.1} parent=1 // pred_region
      %1202 = dma.done [#allocation4], 256
    $region89: #{tpu_custom_call.1} parent=1 // pred_fallthru
      _
    %1203 = vsyncpa [#allocation3], 1
    %1204 = vsyncpa [#allocation6], 1
    %1205 = vsyncpa [#allocation9], 1
    %1206 = vsyncpa [#allocation12], 1
    %1207 = vsyncpa [#allocation4], 1

</llo_original>
